<compile_context>
chip_gen: v7x
topology: tpu7x:2x2x1
jax: 0.10.0
libtpu: 0.0.40
codegen_flags: <defaults>
</compile_context>

<pallas_src>
import functools

import jax
import jax.numpy as jnp
from jax.experimental import pallas as pl
from jax.experimental.pallas import tpu as pltpu


def _round_up(x, m):
    return ((x + m - 1) // m) * m


def _tpu_vmem_capacity_bytes():
    """Physical VMEM capacity of the current TPU; conservative fallback."""
    try:
        return int(pltpu.get_tpu_info().vmem_capacity_bytes)
    except Exception:
        return 64 * 1024 * 1024  # v7x-safe default


def make_textcnn_kernel(k_max):
    """Kernel body. Closes over static config only."""

    def kernel(emb_ref, wconv_ref, bm_ref, fcw_ref, fcb_ref, out_ref):
        emb = emb_ref[...]                                  # (bt, L, E) bf16
        bt, L, E = emb.shape
        c_pad = wconv_ref.shape[1]

        # Time-axis zero padding done in VMEM (not in HBM by the wrapper).
        emb_p = jnp.concatenate(
            [emb, jnp.zeros((bt, k_max - 1, E), emb.dtype)], axis=1)

        # im2col: window[b, t] = concat(emb_p[b, t + dk, :] for dk in 0..k_max-1)
        windows = jnp.concatenate(
            [emb_p[:, dk:dk + L, :] for dk in range(k_max)], axis=-1)
        win2d = windows.reshape(bt * L, k_max * E)          # (bt*L, k_max*E)

        # One MXU matmul for all filter sizes (bf16 in, f32 accumulate).
        conv = jnp.dot(win2d, wconv_ref[...],
                       preferred_element_type=jnp.float32)  # (bt*L, C_PAD)
        conv = conv.reshape(bt, L, c_pad)

        # bm_ref holds the conv bias at valid (t, filter) positions and -1e30 at
        # invalid ones, so this single add + ReLU also applies the per-filter
        # time mask (ReLU clamps -1e30 to 0; max-pool then ignores it).
        conv = jnp.maximum(conv + bm_ref[...], 0.0)
        pooled = jnp.max(conv, axis=1)                      # (bt, C_PAD) f32

        # BatchNorm (eval) is pre-folded into fcw/fcb in the wrapper.
        out = jnp.dot(pooled.astype(fcw_ref.dtype), fcw_ref[...],
                      preferred_element_type=jnp.float32)   # (bt, N_PAD)
        out_ref[...] = (out + fcb_ref[...]).astype(out_ref.dtype)

    return kernel


@functools.partial(jax.jit, static_argnames=("filter_sizes", "n_class", "block_b"))
def textcnn_forward(x_tokens, params, *, filter_sizes, n_class, block_b=None):
    filter_sizes = tuple(filter_sizes)
    K = len(filter_sizes)
    k_max = max(filter_sizes)
    eps = 1e-5

    emb_tab = params["embedding"]
    E = emb_tab.shape[1]
    nf = params["conv_w0"].shape[2]
    C = K * nf
    C_PAD = _round_up(C, 128)
    N_PAD = _round_up(n_class, 128)

    B, L = x_tokens.shape

    # ---- weight prep (tiny, XLA-side) ----------------------------------------
    # Stack all conv weights into one (k_max*E, C_PAD) matrix; rows beyond k*E
    # are zero for smaller filter sizes. Row dk*E + e <-> tap dk, embedding dim e.
    wconv = jnp.zeros((k_max * E, C_PAD), jnp.float32)
    bconv = jnp.zeros((C_PAD,), jnp.float32)
    for g, k in enumerate(filter_sizes):
        w = params[f"conv_w{g}"]                                  # (k, E, F)
        wconv = wconv.at[:k * E, g * nf:(g + 1) * nf].set(w.reshape(k * E, nf))
        bconv = bconv.at[g * nf:(g + 1) * nf].set(params[f"conv_b{g}"][0])

    # Pre-ReLU additive bias+mask (replaces the in-kernel iota/where mask).
    t_idx = jnp.arange(L)[:, None]
    c_idx = jnp.arange(C_PAD)[None, :]
    valid = jnp.zeros((L, C_PAD), jnp.bool_)
    for g, k in enumerate(filter_sizes):
        valid = valid | ((c_idx >= g * nf) & (c_idx < (g + 1) * nf)
                         & (t_idx < L - k + 1))
    bias_mask = jnp.where(valid, bconv[None, :], -1e30).astype(jnp.float32)

    # Fold eval-mode BatchNorm1d into the FC layer.
    scale = params["bn_gamma"][0] * jax.lax.rsqrt(params["bn_var"][0] + eps)  # (C,)
    shift = params["bn_beta"][0] - params["bn_mean"][0] * scale               # (C,)
    fcw_fold = scale[:, None] * params["fc_w"]                                # (C, n_class)
    fcb_fold = params["fc_b"][0] + shift @ params["fc_w"]                     # (n_class,)
    fcw_pad = jnp.zeros((C_PAD, N_PAD), jnp.float32).at[:C, :n_class].set(fcw_fold)
    fcb_pad = jnp.zeros((1, N_PAD), jnp.float32).at[0, :n_class].set(fcb_fold)

    # ---- activation: embedding lookup (bf16); no HBM-side time padding -------
    # TODO(synk): fuse this gather into the kernel (scalar-prefetch token ids +
    #             per-row DMA gather) to remove an HBM round trip.
    emb = jnp.take(emb_tab, x_tokens, axis=0).astype(jnp.bfloat16)            # (B, L, E)

    # ---- batch-tile selection driven by per-generation VMEM capacity ---------
    vmem_cap = _tpu_vmem_capacity_bytes()
    two_core_chip = vmem_cap <= 64 * 1024 * 1024          # v7x heuristic (2 TCs)

    weight_bytes = (k_max * E * C_PAD) * 2 + L * C_PAD * 4 + C_PAD * N_PAD * 2 + N_PAD * 4
    per_row_bytes = (2 * L * E * 2          # double-buffered bf16 input tile
                     + L * k_max * E * 2    # im2col windows (bf16)
                     + 2 * L * C_PAD * 4    # f32 conv activations + relayout headroom
                     + 2 * N_PAD * 4)       # double-buffered f32 output tile
    budget = int(vmem_cap * 0.45)            # leave compiler-scratch headroom
    avail = max(budget - 2 * weight_bytes, 8 * per_row_bytes)
    bt_cap = max(8, (avail // per_row_bytes) // 8 * 8)

    B8 = _round_up(B, 8)
    bt = B8 if block_b is None else min(_round_up(block_b, 8), B8)
    bt = min(bt, bt_cap)
    if two_core_chip and B8 >= 16:
        # Keep at least 2 grid steps so ("parallel",) feeds both TensorCores.
        bt = min(bt, _round_up((B8 + 1) // 2, 8))
    bt = max(8, bt)

    B_grid = _round_up(B, bt)                # pad batch so the grid divides exactly
    grid = (B_grid // bt,)
    if B_grid != B:
        emb = jnp.pad(emb, ((0, B_grid - B), (0, 0), (0, 0)))

    tile_bytes = 2 * weight_bytes + bt * per_row_bytes
    vmem_limit = int(min(vmem_cap, max(int(1.5 * tile_bytes), 32 * 1024 * 1024)))

    kernel = make_textcnn_kernel(k_max)
    out_pad = pl.pallas_call(
        kernel,
        out_shape=jax.ShapeDtypeStruct((B_grid, N_PAD), jnp.float32),
        grid=grid,
        in_specs=[
            pl.BlockSpec((bt, L, E), lambda i: (i, 0, 0)),           # activation tile
            pl.BlockSpec((k_max * E, C_PAD), lambda i: (0, 0)),      # stacked conv W
            pl.BlockSpec((L, C_PAD), lambda i: (0, 0)),              # bias + (-inf) mask
            pl.BlockSpec((C_PAD, N_PAD), lambda i: (0, 0)),          # BN-folded fc W
            pl.BlockSpec((1, N_PAD), lambda i: (0, 0)),              # BN-folded fc b
        ],
        out_specs=pl.BlockSpec((bt, N_PAD), lambda i: (i, 0)),
        compiler_params=pltpu.CompilerParams(
            dimension_semantics=("parallel",),
            vmem_limit_bytes=vmem_limit,
        ),
    )(emb, wconv.astype(jnp.bfloat16), bias_mask,
      fcw_pad.astype(jnp.bfloat16), fcb_pad)

    return out_pad[:B, :n_class]


def textcnn_reference(x_tokens, params, *, filter_sizes, n_class, eps=1e-5):
    """Pure-JAX f32 reference matching the PyTorch module (eval mode)."""
    emb = jnp.take(params["embedding"], x_tokens, axis=0)          # (B, L, E)
    B, L, E = emb.shape
    pooled = []
    for g, k in enumerate(filter_sizes):
        w = params[f"conv_w{g}"]                                    # (k, E, F)
        b = params[f"conv_b{g}"][0]
        T = L - k + 1
        acc = jnp.zeros((B, T, w.shape[2]), jnp.float32)
        for dk in range(k):
            acc = acc + jnp.einsum("bte,ef->btf", emb[:, dk:dk + T, :], w[dk])
        acc = jax.nn.relu(acc + b[None, None, :])
        pooled.append(jnp.max(acc, axis=1))
    feat = jnp.concatenate(pooled, axis=-1)
    scale = params["bn_gamma"][0] * jax.lax.rsqrt(params["bn_var"][0] + eps)
    feat = (feat - params["bn_mean"][0]) * scale + params["bn_beta"][0]
    return feat @ params["fc_w"] + params["fc_b"][0]


def init_params(key, *, vocab_size, embedding_dim, filter_sizes, num_filters, n_class):
    params = {}
    keys = jax.random.split(key, 4 + 2 * len(filter_sizes))
    ki = iter(keys)

    # pretrained embedding table
    params["embedding"] = jax.random.normal(
        next(ki), (vocab_size, embedding_dim), jnp.float32) * 0.1

    # conv weights: PyTorch shape (F, 1, k, E) -> layout (k, E, F)
    for i, k in enumerate(filter_sizes):
        fan_in, fan_out = k * embedding_dim, num_filters
        bound = (6.0 / (fan_in + fan_out)) ** 0.5                   # xavier_uniform
        params[f"conv_w{i}"] = jax.random.uniform(
            next(ki), (k, embedding_dim, num_filters), jnp.float32, -bound, bound)
        params[f"conv_b{i}"] = jax.random.uniform(
            next(ki), (1, num_filters), jnp.float32, -0.1, 0.1)

    feat_dim = num_filters * len(filter_sizes)
    # BatchNorm1d fresh-init parameters (eval mode / running stats)
    params["bn_gamma"] = jnp.ones((1, feat_dim), jnp.float32)
    params["bn_beta"] = jnp.zeros((1, feat_dim), jnp.float32)
    params["bn_mean"] = jnp.zeros((1, feat_dim), jnp.float32)
    params["bn_var"] = jnp.ones((1, feat_dim), jnp.float32)

    # fc: PyTorch (n_class, feat_dim) -> layout (feat_dim, n_class)
    bound = (6.0 / (feat_dim + n_class)) ** 0.5                     # xavier_uniform
    params["fc_w"] = jax.random.uniform(
        next(ki), (feat_dim, n_class), jnp.float32, -bound, bound)
    params["fc_b"] = jax.random.uniform(
        next(ki), (1, n_class), jnp.float32, -0.1, 0.1)
    return params


if __name__ == "__main__":
    # Small, deterministic config consistent with the module's __init__.
    batch = 16
    vocab_size = 50
    pad_size = 16          # sequence length L
    embedding_dim = 32     # k_max * E = 128 -> full-depth MXU contraction
    filter_sizes = (2, 3, 4)
    num_filters = 8
    n_class = 4

    key = jax.random.PRNGKey(0)
    k_params, k_tokens = jax.random.split(key)

    params = init_params(
        k_params,
        vocab_size=vocab_size, embedding_dim=embedding_dim,
        filter_sizes=filter_sizes, num_filters=num_filters, n_class=n_class)

    x = jax.random.randint(k_tokens, (batch, pad_size), 0, vocab_size, jnp.int32)

    # block_b=8 exercises the batch-tiled pipeline (grid=(2,)); the default
    # (block_b=None) picks the largest VMEM-fitting tile automatically.
    out = textcnn_forward(x, params, filter_sizes=filter_sizes, n_class=n_class,
                          block_b=8)
    out = jax.block_until_ready(out)

    assert out.shape == (batch, n_class), out.shape
    assert out.dtype == jnp.float32

    # Correctness vs. f32 plain-JAX reference (loose tol for bf16 MXU inputs).
    ref = textcnn_reference(x, params, filter_sizes=filter_sizes, n_class=n_class)
    max_err = float(jnp.max(jnp.abs(out - ref)))
    assert max_err < 5e-2, f"max abs error {max_err}"

    print("KERNEL_OK")
</pallas_src>

<mosaic_0001>
module attributes {stable_mosaic.version = 11 : i64} {
  func.func @kernel(%arg0: i32, %arg1: memref<8x16x32xbf16, #tpu.memory_space<vmem>>, %arg2: memref<128x128xbf16, #tpu.memory_space<vmem>>, %arg3: memref<16x128xf32, #tpu.memory_space<vmem>>, %arg4: memref<128x128xbf16, #tpu.memory_space<vmem>>, %arg5: memref<1x128xf32, #tpu.memory_space<vmem>>, %arg6: memref<8x128xf32, #tpu.memory_space<vmem>>) attributes {dimension_semantics = [#tpu.dimension_semantics<parallel>], iteration_bounds = array<i64: 2>, scalar_prefetch = 0 : i64, scratch_operands = 0 : i64, tpu.core_type = #tpu.core_type<tc>, window_params = [{transform_indices = @transform_0, window_bounds = array<i64: 8, 16, 32>}, {pipeline_mode = #tpu.pipeline_mode<synchronous>, transform_indices = @transform_1, window_bounds = array<i64: 128, 128>}, {pipeline_mode = #tpu.pipeline_mode<synchronous>, transform_indices = @transform_2, window_bounds = array<i64: 16, 128>}, {pipeline_mode = #tpu.pipeline_mode<synchronous>, transform_indices = @transform_3, window_bounds = array<i64: 128, 128>}, {pipeline_mode = #tpu.pipeline_mode<synchronous>, transform_indices = @transform_4, window_bounds = array<i64: 1, 128>}, {transform_indices = @transform_5, window_bounds = array<i64: 8, 128>}]} {
    %c0 = arith.constant 0 : index
    %c0_0 = arith.constant 0 : index
    %c0_1 = arith.constant 0 : index
    %0 = vector.load %arg1[%c0, %c0_0, %c0_1] : memref<8x16x32xbf16, #tpu.memory_space<vmem>>, vector<8x16x32xbf16>
    %cst = arith.constant 0.000000e+00 : bf16
    %1 = vector.broadcast %cst : bf16 to vector<8x3x32xbf16>
    %2 = tpu.concatenate %0, %1 in 1 : vector<8x16x32xbf16>, vector<8x3x32xbf16> -> vector<8x19x32xbf16>
    %3 = vector.extract_strided_slice %2 {offsets = [0, 0, 0], sizes = [8, 16, 32], strides = [1, 1, 1]} : vector<8x19x32xbf16> to vector<8x16x32xbf16>
    %4 = vector.extract_strided_slice %2 {offsets = [0, 1, 0], sizes = [8, 16, 32], strides = [1, 1, 1]} : vector<8x19x32xbf16> to vector<8x16x32xbf16>
    %5 = vector.extract_strided_slice %2 {offsets = [0, 2, 0], sizes = [8, 16, 32], strides = [1, 1, 1]} : vector<8x19x32xbf16> to vector<8x16x32xbf16>
    %6 = vector.extract_strided_slice %2 {offsets = [0, 3, 0], sizes = [8, 16, 32], strides = [1, 1, 1]} : vector<8x19x32xbf16> to vector<8x16x32xbf16>
    %7 = tpu.concatenate %3, %4, %5, %6 in 2 : vector<8x16x32xbf16>, vector<8x16x32xbf16>, vector<8x16x32xbf16>, vector<8x16x32xbf16> -> vector<8x16x128xbf16>
    %8 = vector.shape_cast %7 : vector<8x16x128xbf16> to vector<128x128xbf16>
    %c0_2 = arith.constant 0 : index
    %c0_3 = arith.constant 0 : index
    %9 = vector.load %arg2[%c0_2, %c0_3] : memref<128x128xbf16, #tpu.memory_space<vmem>>, vector<128x128xbf16>
    %cst_4 = arith.constant dense<0.000000e+00> : vector<128x128xf32>
    %10 = tpu.matmul %8, %9, %cst_4 {dimension_numbers = #tpu.dot_dimension_numbers<[1], [0], [0], [1], [0, 0, 1, 1], [], []>} : vector<128x128xbf16>, vector<128x128xbf16>, vector<128x128xf32> -> vector<128x128xf32>
    %11 = vector.shape_cast %10 : vector<128x128xf32> to vector<8x16x128xf32>
    %c0_5 = arith.constant 0 : index
    %c0_6 = arith.constant 0 : index
    %12 = vector.load %arg3[%c0_5, %c0_6] : memref<16x128xf32, #tpu.memory_space<vmem>>, vector<16x128xf32>
    %13 = vector.shape_cast %12 : vector<16x128xf32> to vector<1x16x128xf32>
    %14 = vector.broadcast %13 : vector<1x16x128xf32> to vector<8x16x128xf32>
    %15 = arith.addf %11, %14 : vector<8x16x128xf32>
    %cst_7 = arith.constant 0.000000e+00 : f32
    %16 = vector.broadcast %cst_7 : f32 to vector<8x16x128xf32>
    %17 = arith.maximumf %15, %16 : vector<8x16x128xf32>
    %cst_8 = arith.constant dense<0xFF800000> : vector<8x128xf32>
    %18 = vector.multi_reduction <maximumf>, %17, %cst_8 [1] : vector<8x16x128xf32> to vector<8x128xf32>
    %19 = arith.truncf %18 : vector<8x128xf32> to vector<8x128xbf16>
    %c0_9 = arith.constant 0 : index
    %c0_10 = arith.constant 0 : index
    %20 = vector.load %arg4[%c0_9, %c0_10] : memref<128x128xbf16, #tpu.memory_space<vmem>>, vector<128x128xbf16>
    %cst_11 = arith.constant dense<0.000000e+00> : vector<8x128xf32>
    %21 = tpu.matmul %19, %20, %cst_11 {dimension_numbers = #tpu.dot_dimension_numbers<[1], [0], [0], [1], [0, 0, 1, 1], [], []>} : vector<8x128xbf16>, vector<128x128xbf16>, vector<8x128xf32> -> vector<8x128xf32>
    %c0_12 = arith.constant 0 : index
    %c0_13 = arith.constant 0 : index
    %22 = vector.load %arg5[%c0_12, %c0_13] : memref<1x128xf32, #tpu.memory_space<vmem>>, vector<1x128xf32>
    %23 = vector.broadcast %22 : vector<1x128xf32> to vector<8x128xf32>
    %24 = arith.addf %21, %23 : vector<8x128xf32>
    %c0_14 = arith.constant 0 : index
    %c0_15 = arith.constant 0 : index
    %25 = vector.load %arg6[%c0_14, %c0_15] : memref<8x128xf32, #tpu.memory_space<vmem>>, vector<8x128xf32>
    tpu.vector_store %arg6[%c0_14, %c0_15], %24 {strides = array<i32>} : memref<8x128xf32, #tpu.memory_space<vmem>>, vector<8x128xf32>,
    return
  }
  func.func @transform_0(%arg0: i32) -> (i32, i32, i32) {
    %c0_i32 = arith.constant 0 : i32
    %c0_i32_0 = arith.constant 0 : i32
    %c0_i32_1 = arith.constant 0 : i32
    return %arg0, %c0_i32, %c0_i32_0 : i32, i32, i32
  }
  func.func @transform_1(%arg0: i32) -> (i32, i32) {
    %c0_i32 = arith.constant 0 : i32
    %c0_i32_0 = arith.constant 0 : i32
    %c0_i32_1 = arith.constant 0 : i32
    return %c0_i32, %c0_i32_0 : i32, i32
  }
  func.func @transform_2(%arg0: i32) -> (i32, i32) {
    %c0_i32 = arith.constant 0 : i32
    %c0_i32_0 = arith.constant 0 : i32
    %c0_i32_1 = arith.constant 0 : i32
    return %c0_i32, %c0_i32_0 : i32, i32
  }
  func.func @transform_3(%arg0: i32) -> (i32, i32) {
    %c0_i32 = arith.constant 0 : i32
    %c0_i32_0 = arith.constant 0 : i32
    %c0_i32_1 = arith.constant 0 : i32
    return %c0_i32, %c0_i32_0 : i32, i32
  }
  func.func @transform_4(%arg0: i32) -> (i32, i32) {
    %c0_i32 = arith.constant 0 : i32
    %c0_i32_0 = arith.constant 0 : i32
    %c0_i32_1 = arith.constant 0 : i32
    return %c0_i32, %c0_i32_0 : i32, i32
  }
  func.func @transform_5(%arg0: i32) -> (i32, i32) {
    %c0_i32 = arith.constant 0 : i32
    %c0_i32_0 = arith.constant 0 : i32
    return %arg0, %c0_i32 : i32, i32
  }
}

</mosaic_0001>

<llo_original>
// kernel: textcnn_forward.1
$region0: #{textcnn_forward.1}
  #allocation0 [shape = 'u32[]', space=smem, size = 0x4, offset = 0x4, fixed_abs, tag = 'smem constant byte address 0x4 - core index']
  #allocation1 [shape = 'u32[144,128]{1,0:T(1,128)}', space=vmem, size = 0x12000, scoped, tag = 'internal scratch']
  %s0 = inlined_call_operand.vmem [shape: bf16[16,16,32], index: 0, kind: input, shape index: {}]
  %s1 = inlined_call_operand.vmem [shape: bf16[128,128], index: 1, kind: input, shape index: {}]
  %s2 = inlined_call_operand.vmem [shape: f32[16,128], index: 2, kind: input, shape index: {}]
  %s3 = inlined_call_operand.vmem [shape: bf16[128,128], index: 3, kind: input, shape index: {}]
  %s4 = inlined_call_operand.vmem [shape: f32[1,128], index: 4, kind: input, shape index: {}]
  %s5 = inlined_call_operand.vmem [shape: f32[16,128], index: 5, kind: output, shape index: {}]
  %s6 = sld [smem:[#allocation0]]
  $region53: #{textcnn_forward.1} parent=0
    _
  %s8 = ssub.s32 1, %s6
  %s9 = scalar_select 0, %s8, %s6
  loop: start=0, step=1, limit=4
  $region2: #{textcnn_forward.1} parent=0 // loop_pre_header
    _
  $region3: #{textcnn_forward.1} parent=0 // loop_header
    %s11 = sphi 0, %s15
    %p12 = scmp.ge.s32.totalorder %s11, 4
    %s21 = sphi 0, %s23
    %s24 = sphi 0, %s21
    %s25 = sphi 0, %s24
    %s41 = sphi 0, %s25
    %s45 = sphi 0, %s45
    %s47 = sphi 0, %s45
    %s48 = sphi 0, %s47
    %s62 = sphi 0, %s48
    %s66 = sphi 0, %s66
    %s68 = sphi 0, %s66
    %s69 = sphi 0, %s68
    %s83 = sphi 0, %s69
    %s87 = sphi 0, %s87
    %s89 = sphi 0, %s87
    %s90 = sphi 0, %s89
    %s104 = sphi 0, %s90
    %s108 = sphi 0, %s108
    %s110 = sphi 0, %s108
    %s111 = sphi 0, %s110
    %s125 = sphi 0, %s111
    %s131 = sphi 0, %s133
    %s134 = sphi 0, %s131
    %s135 = sphi 0, %s134
    %s151 = sphi 0, %s135
  $region4: #{textcnn_forward.1} parent=0 // loop_header_branch
    %14 = sbr.rel (%p12) target = $region8
  $region5: #{textcnn_forward.1} parent=0 // loop_body
    %s16 = ssub.s32 %s11, 1
    %s17 = ssub.s32 %s11, 2
    %s18 = sadd.s32 %s11, 1
    %s19 = ssub.s32 %s11, %s18
    %p20 = scmp.eq.s32.totalorder %s19, 0
    %s22 = sadd.s32 %s21, 1
    %s23 = scalar_select %p20, %s21, %s22
    %p26 = pneg %p20
    %p27 = scmp.eq.s32.totalorder %s11, 1
    %p28 = por %p26, %p27
    %p29 = scmp.ne.s32.totalorder %s21, %s24
    %p30 = scmp.eq.s32.totalorder %s11, 0
    %p31 = por %p29, %p30
    %p32 = scmp.ne.s32.totalorder %s21, %s24
    %p33 = scmp.eq.s32.totalorder %s16, 1
    %p34 = por %p32, %p33
    %p35 = scmp.ne.s32.totalorder %s24, %s25
    %p36 = scmp.eq.s32.totalorder %s16, 0
    %p37 = por %p35, %p36
    %p38 = scmp.ne.s32.totalorder %s24, %s25
    %p39 = scmp.eq.s32.totalorder %s17, 1
    %p40 = por %p38, %p39
    %p42 = scmp.ne.s32.totalorder %s25, %s41
    %p43 = scmp.eq.s32.totalorder %s17, 0
    %p44 = por %p42, %p43
    %s46 = sadd.s32 %s45, 1
    %p49 = scmp.eq.s32.totalorder %s11, 1
    %p50 = scmp.ne.s32.totalorder %s45, %s47
    %p51 = scmp.eq.s32.totalorder %s11, 0
    %p52 = por %p50, %p51
    %p53 = scmp.ne.s32.totalorder %s45, %s47
    %p54 = scmp.eq.s32.totalorder %s16, 1
    %p55 = por %p53, %p54
    %p56 = scmp.ne.s32.totalorder %s47, %s48
    %p57 = scmp.eq.s32.totalorder %s16, 0
    %p58 = por %p56, %p57
    %p59 = scmp.ne.s32.totalorder %s47, %s48
    %p60 = scmp.eq.s32.totalorder %s17, 1
    %p61 = por %p59, %p60
    %p63 = scmp.ne.s32.totalorder %s48, %s62
    %p64 = scmp.eq.s32.totalorder %s17, 0
    %p65 = por %p63, %p64
    %s67 = sadd.s32 %s66, 1
    %p70 = scmp.eq.s32.totalorder %s11, 1
    %p71 = scmp.ne.s32.totalorder %s66, %s68
    %p72 = scmp.eq.s32.totalorder %s11, 0
    %p73 = por %p71, %p72
    %p74 = scmp.ne.s32.totalorder %s66, %s68
    %p75 = scmp.eq.s32.totalorder %s16, 1
    %p76 = por %p74, %p75
    %p77 = scmp.ne.s32.totalorder %s68, %s69
    %p78 = scmp.eq.s32.totalorder %s16, 0
    %p79 = por %p77, %p78
    %p80 = scmp.ne.s32.totalorder %s68, %s69
    %p81 = scmp.eq.s32.totalorder %s17, 1
    %p82 = por %p80, %p81
    %p84 = scmp.ne.s32.totalorder %s69, %s83
    %p85 = scmp.eq.s32.totalorder %s17, 0
    %p86 = por %p84, %p85
    %s88 = sadd.s32 %s87, 1
    %p91 = scmp.eq.s32.totalorder %s11, 1
    %p92 = scmp.ne.s32.totalorder %s87, %s89
    %p93 = scmp.eq.s32.totalorder %s11, 0
    %p94 = por %p92, %p93
    %p95 = scmp.ne.s32.totalorder %s87, %s89
    %p96 = scmp.eq.s32.totalorder %s16, 1
    %p97 = por %p95, %p96
    %p98 = scmp.ne.s32.totalorder %s89, %s90
    %p99 = scmp.eq.s32.totalorder %s16, 0
    %p100 = por %p98, %p99
    %p101 = scmp.ne.s32.totalorder %s89, %s90
    %p102 = scmp.eq.s32.totalorder %s17, 1
    %p103 = por %p101, %p102
    %p105 = scmp.ne.s32.totalorder %s90, %s104
    %p106 = scmp.eq.s32.totalorder %s17, 0
    %p107 = por %p105, %p106
    %s109 = sadd.s32 %s108, 1
    %p112 = scmp.eq.s32.totalorder %s11, 1
    %p113 = scmp.ne.s32.totalorder %s108, %s110
    %p114 = scmp.eq.s32.totalorder %s11, 0
    %p115 = por %p113, %p114
    %p116 = scmp.ne.s32.totalorder %s108, %s110
    %p117 = scmp.eq.s32.totalorder %s16, 1
    %p118 = por %p116, %p117
    %p119 = scmp.ne.s32.totalorder %s110, %s111
    %p120 = scmp.eq.s32.totalorder %s16, 0
    %p121 = por %p119, %p120
    %p122 = scmp.ne.s32.totalorder %s110, %s111
    %p123 = scmp.eq.s32.totalorder %s17, 1
    %p124 = por %p122, %p123
    %p126 = scmp.ne.s32.totalorder %s111, %s125
    %p127 = scmp.eq.s32.totalorder %s17, 0
    %p128 = por %p126, %p127
    %s129 = ssub.s32 %s11, %s18
    %p130 = scmp.eq.s32.totalorder %s129, 0
    %s132 = sadd.s32 %s131, 1
    %s133 = scalar_select %p130, %s131, %s132
    %p136 = pneg %p130
    %p137 = scmp.eq.s32.totalorder %s11, 1
    %p138 = por %p136, %p137
    %p139 = scmp.ne.s32.totalorder %s131, %s134
    %p140 = scmp.eq.s32.totalorder %s11, 0
    %p141 = por %p139, %p140
    %p142 = scmp.ne.s32.totalorder %s131, %s134
    %p143 = scmp.eq.s32.totalorder %s16, 1
    %p144 = por %p142, %p143
    %p145 = scmp.ne.s32.totalorder %s134, %s135
    %p146 = scmp.eq.s32.totalorder %s16, 0
    %p147 = por %p145, %p146
    %p148 = scmp.ne.s32.totalorder %s134, %s135
    %p149 = scmp.eq.s32.totalorder %s17, 1
    %p150 = por %p148, %p149
    %p152 = scmp.ne.s32.totalorder %s135, %s151
    %p153 = scmp.eq.s32.totalorder %s17, 0
    %p154 = por %p152, %p153
    %p155 = scmp.le.s32.totalorder 1, %s11
    %p156 = scmp.lt.s32.totalorder %s11, 3
    %p157 = pnand %p155, %p156
    %p158 = pneg %p157
    // Predicated region
    $region9: #{textcnn_forward.1} parent=5 // pred_check
      _
    $region10: #{textcnn_forward.1} parent=5 // pred_check_branch
      %160 = sbr.rel (%p157) target = $region12
    $region11: #{textcnn_forward.1} parent=5 // pred_region
      %s161 = ssub.s32 %s11, 1
      // Predicated region
      $region13: #{textcnn_forward.1} parent=11 // pred_check
        %p162 = pneg %p58
      $region14: #{textcnn_forward.1} parent=11 // pred_check_branch
        %164 = sbr.rel (%p162) target = $region16
      $region15: #{textcnn_forward.1} parent=11 // pred_region
        _
      $region16: #{textcnn_forward.1} parent=11 // pred_fallthru
        _
      // Predicated region
      $region17: #{textcnn_forward.1} parent=11 // pred_check
        %p165 = pneg %p79
      $region18: #{textcnn_forward.1} parent=11 // pred_check_branch
        %167 = sbr.rel (%p165) target = $region20
      $region19: #{textcnn_forward.1} parent=11 // pred_region
        _
      $region20: #{textcnn_forward.1} parent=11 // pred_fallthru
        _
      // Predicated region
      $region21: #{textcnn_forward.1} parent=11 // pred_check
        %p168 = pneg %p100
      $region22: #{textcnn_forward.1} parent=11 // pred_check_branch
        %170 = sbr.rel (%p168) target = $region24
      $region23: #{textcnn_forward.1} parent=11 // pred_region
        _
      $region24: #{textcnn_forward.1} parent=11 // pred_fallthru
        _
      // Predicated region
      $region25: #{textcnn_forward.1} parent=11 // pred_check
        %p171 = pneg %p121
      $region26: #{textcnn_forward.1} parent=11 // pred_check_branch
        %173 = sbr.rel (%p171) target = $region28
      $region27: #{textcnn_forward.1} parent=11 // pred_region
        _
      $region28: #{textcnn_forward.1} parent=11 // pred_fallthru
        _
    $region12: #{textcnn_forward.1} parent=5 // pred_fallthru
      _
    %p174 = scmp.lt.s32.totalorder %s11, 2
    // Predicated region
    $region29: #{textcnn_forward.1} parent=5 // pred_check
      %p175 = pneg %p174
    $region30: #{textcnn_forward.1} parent=5 // pred_check_branch
      %177 = sbr.rel (%p175) target = $region32
    $region31: #{textcnn_forward.1} parent=5 // pred_region
      // Predicated region
      $region33: #{textcnn_forward.1} parent=31 // pred_check
        %p178 = pneg %p31
      $region34: #{textcnn_forward.1} parent=31 // pred_check_branch
        %180 = sbr.rel (%p178) target = $region36
      $region35: #{textcnn_forward.1} parent=31 // pred_region
        %s181 = smul.u32 8, %s11
        %p182 = scmp.lt.s32.totalorder %s181, 15
        %s183 = scalar_select %p182, %s181, 15
        %s184 = smul.addr %s183, 2
        %s185 = smul.addr %s184, 4
        %s186 = scalar_lea.vmem %s0, %s185
        %s187 = smul.u32 8, %s11
      $region36: #{textcnn_forward.1} parent=31 // pred_fallthru
        _
    $region32: #{textcnn_forward.1} parent=5 // pred_fallthru
      _
    %p188 = scmp.le.s32.totalorder 1, %s11
    %p189 = scmp.lt.s32.totalorder %s11, 3
    %p190 = pnand %p188, %p189
    %p191 = pneg %p190
    // Predicated region
    $region37: #{textcnn_forward.1} parent=5 // pred_check
      _
    $region38: #{textcnn_forward.1} parent=5 // pred_check_branch
      %193 = sbr.rel (%p190) target = $region40
    $region39: #{textcnn_forward.1} parent=5 // pred_region
      %s194 = ssub.s32 %s11, 1
      %s195 = smul.u32 8, %s16
      %p196 = scmp.lt.s32.totalorder %s195, 15
      %s197 = scalar_select %p196, %s195, 15
      %s198 = smul.addr %s197, 2
      %s199 = smul.addr %s198, 4
      %s200 = scalar_lea.vmem %s0, %s199
      %p201 = pneg %p37
      %p202 = pneg %p34
      %p203 = pneg %p58
      %p204 = pneg %p55
      %p205 = pneg %p79
      %p206 = pneg %p76
      %p207 = pneg %p100
      %p208 = pneg %p97
      %p209 = pneg %p121
      %p210 = pneg %p118
      %p211 = pneg %p147
      %p212 = pneg %p144
      %p213 = scmp.lt.s32.totalorder %s16, 1
      %s214 = scalar_select %p213, %s16, 1
      %s215 = smul.addr %s214, 8
      %s216 = scalar_lea.vmem %s5, %s215
      %s217 = smul.u32 8, %s16
      %p218 = scmp.lt.s32.totalorder %s217, 15
      %s219 = scalar_select %p218, %s217, 15
      %s220 = smul.addr %s219, 2
      %s221 = smul.addr %s220, 4
      %s222 = scalar_lea.vmem %s0, %s221
      %s223 = smul.u32 8, %s16
      %p224 = scmp.lt.s32.totalorder %s16, 1
      %s225 = scalar_select %p224, %s16, 1
      %s226 = smul.addr %s225, 8
      %s227 = scalar_lea.vmem %s5, %s226
      %v229 = vld [vmem:[%s222] sm:$0xf]
      %v230 = vld [vmem:[%s222 + $0x4] sm:$0xf]
      %v231 = vld [vmem:[%s222 + $0x8] sm:$0xf]
      %v232 = vld [vmem:[%s222 + $0xc] sm:$0xf]
      %v233 = vld [vmem:[%s222 + $0x10] sm:$0xf]
      %v234 = vld [vmem:[%s222 + $0x14] sm:$0xf]
      %v235 = vld [vmem:[%s222 + $0x18] sm:$0xf]
      %v236 = vld [vmem:[%s222 + $0x1c] sm:$0xf]
      %v237 = vld [vmem:[%s222 + $0x20] sm:$0xf]
      %v238 = vld [vmem:[%s222 + $0x24] sm:$0xf]
      %v239 = vld [vmem:[%s222 + $0x28] sm:$0xf]
      %v240 = vld [vmem:[%s222 + $0x2c] sm:$0xf]
      %v241 = vld [vmem:[%s222 + $0x30] sm:$0xf]
      %v242 = vld [vmem:[%s222 + $0x34] sm:$0xf]
      %v243 = vld [vmem:[%s222 + $0x38] sm:$0xf]
      %v244 = vld [vmem:[%s222 + $0x3c] sm:$0xf]
      %v261 = vunpack.c.l.b16 %v229
      %v262 = vunpack.c.l.b16 %v230
      %v263 = vunpack.c.l.b16 %v231
      %v264 = vunpack.c.l.b16 %v232
      %v265 = vunpack.c.l.b16 %v233
      %v266 = vunpack.c.l.b16 %v234
      %v267 = vunpack.c.l.b16 %v235
      %v268 = vunpack.c.l.b16 %v236
      %v269 = vunpack.c.l.b16 %v237
      %v270 = vunpack.c.l.b16 %v238
      %v271 = vunpack.c.l.b16 %v239
      %v272 = vunpack.c.l.b16 %v240
      %v273 = vunpack.c.l.b16 %v241
      %v274 = vunpack.c.l.b16 %v242
      %v275 = vunpack.c.l.b16 %v243
      %v276 = vunpack.c.l.b16 %v244
      %v277 = vpack.c.b16 %v262, %v261
      %v278 = vpack.c.b16 %v264, %v263
      %v279 = vpack.c.b16 %v266, %v265
      %v280 = vpack.c.b16 %v268, %v267
      %v281 = vpack.c.b16 %v270, %v269
      %v282 = vpack.c.b16 %v272, %v271
      %v283 = vpack.c.b16 %v274, %v273
      %v284 = vpack.c.b16 %v276, %v275
      %vm285 = vsmask.f32 7424
      %v287 = vshrl.u32 %v277, 16
      %v289 = vshll.u32 %v277, 16
      %v291 = vrot.slane %v289, 1
      %v292 = vor.u32 %v287, %v291
      %v294 = vshll.u32 0, 16
      %v296 = vrot.slane %v294, 1
      %v297 = vsel %vm285, %v292, %v296
      %v299 = vshrl.u32 %v278, 16
      %v301 = vshll.u32 %v278, 16
      %v303 = vrot.slane %v301, 1
      %v304 = vor.u32 %v299, %v303
      %v305 = vsel %vm285, %v304, %v296
      %v307 = vshrl.u32 %v279, 16
      %v309 = vshll.u32 %v279, 16
      %v311 = vrot.slane %v309, 1
      %v312 = vor.u32 %v307, %v311
      %v313 = vsel %vm285, %v312, %v296
      %v315 = vshrl.u32 %v280, 16
      %v317 = vshll.u32 %v280, 16
      %v319 = vrot.slane %v317, 1
      %v320 = vor.u32 %v315, %v319
      %v321 = vsel %vm285, %v320, %v296
      %v323 = vshrl.u32 %v281, 16
      %v325 = vshll.u32 %v281, 16
      %v327 = vrot.slane %v325, 1
      %v328 = vor.u32 %v323, %v327
      %v329 = vsel %vm285, %v328, %v296
      %v331 = vshrl.u32 %v282, 16
      %v333 = vshll.u32 %v282, 16
      %v335 = vrot.slane %v333, 1
      %v336 = vor.u32 %v331, %v335
      %v337 = vsel %vm285, %v336, %v296
      %v339 = vshrl.u32 %v283, 16
      %v341 = vshll.u32 %v283, 16
      %v343 = vrot.slane %v341, 1
      %v344 = vor.u32 %v339, %v343
      %v345 = vsel %vm285, %v344, %v296
      %v347 = vshrl.u32 %v284, 16
      %v349 = vshll.u32 %v284, 16
      %v351 = vrot.slane %v349, 1
      %v352 = vor.u32 %v347, %v351
      %v353 = vsel %vm285, %v352, %v296
      %354 = vrot.lane.b32.xlu0 %v297, 32
      %v355 = vpop.permute.xlu0 %354
      %356 = vrot.lane.b32.xlu0 %v305, 32
      %v357 = vpop.permute.xlu0 %356
      %358 = vrot.lane.b32.xlu0 %v313, 32
      %v359 = vpop.permute.xlu0 %358
      %360 = vrot.lane.b32.xlu0 %v321, 32
      %v361 = vpop.permute.xlu0 %360
      %362 = vrot.lane.b32.xlu0 %v329, 32
      %v363 = vpop.permute.xlu0 %362
      %364 = vrot.lane.b32.xlu0 %v337, 32
      %v365 = vpop.permute.xlu0 %364
      %366 = vrot.lane.b32.xlu0 %v345, 32
      %v367 = vpop.permute.xlu0 %366
      %368 = vrot.lane.b32.xlu0 %v353, 32
      %v369 = vpop.permute.xlu0 %368
      %vm371 = vcmask 1046528
      %v372 = vrot.slane %v277, 1
      %v373 = vrot.slane 0, 1
      %v374 = vsel %vm371, %v372, %v373
      %v375 = vrot.slane %v278, 1
      %v376 = vsel %vm371, %v375, %v373
      %v377 = vrot.slane %v279, 1
      %v378 = vsel %vm371, %v377, %v373
      %v379 = vrot.slane %v280, 1
      %v380 = vsel %vm371, %v379, %v373
      %v381 = vrot.slane %v281, 1
      %v382 = vsel %vm371, %v381, %v373
      %v383 = vrot.slane %v282, 1
      %v384 = vsel %vm371, %v383, %v373
      %v385 = vrot.slane %v283, 1
      %v386 = vsel %vm371, %v385, %v373
      %v387 = vrot.slane %v284, 1
      %v388 = vsel %vm371, %v387, %v373
      %389 = vrot.lane.b32.xlu0 %v374, 64
      %v390 = vpop.permute.xlu0 %389
      %391 = vrot.lane.b32.xlu0 %v376, 64
      %v392 = vpop.permute.xlu0 %391
      %393 = vrot.lane.b32.xlu0 %v378, 64
      %v394 = vpop.permute.xlu0 %393
      %395 = vrot.lane.b32.xlu0 %v380, 64
      %v396 = vpop.permute.xlu0 %395
      %397 = vrot.lane.b32.xlu0 %v382, 64
      %v398 = vpop.permute.xlu0 %397
      %399 = vrot.lane.b32.xlu0 %v384, 64
      %v400 = vpop.permute.xlu0 %399
      %401 = vrot.lane.b32.xlu0 %v386, 64
      %v402 = vpop.permute.xlu0 %401
      %403 = vrot.lane.b32.xlu0 %v388, 64
      %v404 = vpop.permute.xlu0 %403
      %vm405 = vsmask.f32 6400
      %v406 = vrot.slane %v287, 1
      %v407 = vrot.slane %v289, 2
      %v408 = vor.u32 %v406, %v407
      %v409 = vshrl.u32 0, 16
      %v411 = vrot.slane %v409, 1
      %v412 = vrot.slane %v294, 2
      %v413 = vor.u32 %v411, %v412
      %v414 = vsel %vm405, %v408, %v413
      %v415 = vrot.slane %v299, 1
      %v416 = vrot.slane %v301, 2
      %v417 = vor.u32 %v415, %v416
      %v418 = vsel %vm405, %v417, %v413
      %v419 = vrot.slane %v307, 1
      %v420 = vrot.slane %v309, 2
      %v421 = vor.u32 %v419, %v420
      %v422 = vsel %vm405, %v421, %v413
      %v423 = vrot.slane %v315, 1
      %v424 = vrot.slane %v317, 2
      %v425 = vor.u32 %v423, %v424
      %v426 = vsel %vm405, %v425, %v413
      %v427 = vrot.slane %v323, 1
      %v428 = vrot.slane %v325, 2
      %v429 = vor.u32 %v427, %v428
      %v430 = vsel %vm405, %v429, %v413
      %v431 = vrot.slane %v331, 1
      %v432 = vrot.slane %v333, 2
      %v433 = vor.u32 %v431, %v432
      %v434 = vsel %vm405, %v433, %v413
      %v435 = vrot.slane %v339, 1
      %v436 = vrot.slane %v341, 2
      %v437 = vor.u32 %v435, %v436
      %v438 = vsel %vm405, %v437, %v413
      %v439 = vrot.slane %v347, 1
      %v440 = vrot.slane %v349, 2
      %v441 = vor.u32 %v439, %v440
      %v442 = vsel %vm405, %v441, %v413
      %443 = vrot.lane.b32.xlu0 %v414, 96
      %v444 = vpop.permute.xlu0 %443
      %445 = vrot.lane.b32.xlu0 %v418, 96
      %v446 = vpop.permute.xlu0 %445
      %447 = vrot.lane.b32.xlu0 %v422, 96
      %v448 = vpop.permute.xlu0 %447
      %449 = vrot.lane.b32.xlu0 %v426, 96
      %v450 = vpop.permute.xlu0 %449
      %451 = vrot.lane.b32.xlu0 %v430, 96
      %v452 = vpop.permute.xlu0 %451
      %453 = vrot.lane.b32.xlu0 %v434, 96
      %v454 = vpop.permute.xlu0 %453
      %455 = vrot.lane.b32.xlu0 %v438, 96
      %v456 = vpop.permute.xlu0 %455
      %457 = vrot.lane.b32.xlu0 %v442, 96
      %v458 = vpop.permute.xlu0 %457
      %vm459 = vcmask 261120
      %v461 = vsel %vm459, %v277, %v355
      %v463 = vsel %vm459, %v278, %v357
      %v465 = vsel %vm459, %v279, %v359
      %v467 = vsel %vm459, %v280, %v361
      %v469 = vsel %vm459, %v281, %v363
      %v471 = vsel %vm459, %v282, %v365
      %v473 = vsel %vm459, %v283, %v367
      %v475 = vsel %vm459, %v284, %v369
      %vm476 = vcmask 523264
      %v478 = vsel %vm476, %v461, %v390
      %v480 = vsel %vm476, %v463, %v392
      %v482 = vsel %vm476, %v465, %v394
      %v484 = vsel %vm476, %v467, %v396
      %v486 = vsel %vm476, %v469, %v398
      %v488 = vsel %vm476, %v471, %v400
      %v490 = vsel %vm476, %v473, %v402
      %v492 = vsel %vm476, %v475, %v404
      %vm493 = vcmask 785408
      %v495 = vsel %vm493, %v478, %v444
      %v498 = vsel %vm493, %v480, %v446
      %v501 = vsel %vm493, %v482, %v448
      %v504 = vsel %vm493, %v484, %v450
      %v507 = vsel %vm493, %v486, %v452
      %v510 = vsel %vm493, %v488, %v454
      %v513 = vsel %vm493, %v490, %v456
      %v516 = vsel %vm493, %v492, %v458
      %v518 = vld [vmem:[%s1] sm:$0xf]
      %v519 = vld [vmem:[%s1 + $0x4] sm:$0xf]
      %v520 = vld [vmem:[%s1 + $0x8] sm:$0xf]
      %v521 = vld [vmem:[%s1 + $0xc] sm:$0xf]
      %v522 = vld [vmem:[%s1 + $0x10] sm:$0xf]
      %v523 = vld [vmem:[%s1 + $0x14] sm:$0xf]
      %v524 = vld [vmem:[%s1 + $0x18] sm:$0xf]
      %v525 = vld [vmem:[%s1 + $0x1c] sm:$0xf]
      %v526 = vld [vmem:[%s1 + $0x20] sm:$0xf]
      %v527 = vld [vmem:[%s1 + $0x24] sm:$0xf]
      %v528 = vld [vmem:[%s1 + $0x28] sm:$0xf]
      %v529 = vld [vmem:[%s1 + $0x2c] sm:$0xf]
      %v530 = vld [vmem:[%s1 + $0x30] sm:$0xf]
      %v531 = vld [vmem:[%s1 + $0x34] sm:$0xf]
      %v532 = vld [vmem:[%s1 + $0x38] sm:$0xf]
      %v533 = vld [vmem:[%s1 + $0x3c] sm:$0xf]
      %v550 = vunpack.c.l.b16 %v518
      %v551 = vunpack.c.l.b16 %v519
      %v552 = vunpack.c.l.b16 %v520
      %v553 = vunpack.c.l.b16 %v521
      %v554 = vunpack.c.l.b16 %v522
      %v555 = vunpack.c.l.b16 %v523
      %v556 = vunpack.c.l.b16 %v524
      %v557 = vunpack.c.l.b16 %v525
      %v558 = vunpack.c.l.b16 %v526
      %v559 = vunpack.c.l.b16 %v527
      %v560 = vunpack.c.l.b16 %v528
      %v561 = vunpack.c.l.b16 %v529
      %v562 = vunpack.c.l.b16 %v530
      %v563 = vunpack.c.l.b16 %v531
      %v564 = vunpack.c.l.b16 %v532
      %v565 = vunpack.c.l.b16 %v533
      %v566 = vpack.c.b16 %v551, %v550
      %v567 = vpack.c.b16 %v553, %v552
      %v568 = vpack.c.b16 %v555, %v554
      %v569 = vpack.c.b16 %v557, %v556
      %v570 = vpack.c.b16 %v559, %v558
      %v571 = vpack.c.b16 %v561, %v560
      %v572 = vpack.c.b16 %v563, %v562
      %v573 = vpack.c.b16 %v565, %v564
      %582 = vmatprep.subr.bf16.mxu0 0
      %583 = vmatpush1.bf16.msra.mxu0 %v566
      %584 = vmatprep.subr.bf16.mxu0 0
      %585 = vmatpush1.bf16.msra.mxu0 %v567
      %586 = vmatprep.subr.bf16.mxu0 0
      %587 = vmatpush1.bf16.msra.mxu0 %v568
      %588 = vmatprep.subr.bf16.mxu0 0
      %589 = vmatpush1.bf16.msra.mxu0 %v569
      %590 = vmatprep.subr.bf16.mxu0 0
      %591 = vmatpush1.bf16.msra.mxu0 %v570
      %592 = vmatprep.subr.bf16.mxu0 0
      %593 = vmatpush1.bf16.msra.mxu0 %v571
      %594 = vmatprep.subr.bf16.mxu0 0
      %595 = vmatpush1.bf16.msra.mxu0 %v572
      %596 = vmatprep.subr.bf16.mxu0 0
      %597 = vmatpush1.bf16.msra.mxu0 %v573
      %598 = vmatprep.subr.bf16.mxu0 0
      %599 = vmatpush1.bf16.msra.mxu0 0
      %600 = vmatprep.subr.bf16.mxu0 0
      %601 = vmatpush1.bf16.msra.mxu0 0
      %602 = vmatprep.subr.bf16.mxu0 0
      %603 = vmatpush1.bf16.msra.mxu0 0
      %604 = vmatprep.subr.bf16.mxu0 0
      %605 = vmatpush1.bf16.msra.mxu0 0
      %606 = vmatprep.subr.bf16.mxu0 0
      %607 = vmatpush1.bf16.msra.mxu0 0
      %608 = vmatprep.subr.bf16.mxu0 0
      %609 = vmatpush1.bf16.msra.mxu0 0
      %610 = vmatprep.subr.bf16.mxu0 0
      %611 = vmatpush1.bf16.msra.mxu0 0
      %612 = vmatprep.subr.bf16.mxu0 0
      %613 = vmatpush1.bf16.msra.mxu0 0
      %614 = vmatprep.mubr.bf16.mxu0 0
      %615 = vmatmul.mubr.bf16.gmra.mrb[0].mxu0 %v495
      %v616 = vpop.f32.mrb[0].mxu0
      %v617 = vadd.f32 0.0, %v616
      %v618 = vpop.f32.mrb[0].mxu0
      %v619 = vpop.f32.mrb[0].mxu0
      %v620 = vadd.f32 0.0, %v619
      %v621 = vpop.f32.mrb[0].mxu0
      %622 = vmatprep.mubr.bf16.mxu0 0
      %623 = vmatmul.mubr.bf16.gmra.mrb[0].mxu0 %v498
      %v624 = vpop.f32.mrb[0].mxu0
      %v625 = vadd.f32 0.0, %v624
      %v626 = vpop.f32.mrb[0].mxu0
      %v627 = vpop.f32.mrb[0].mxu0
      %v628 = vadd.f32 0.0, %v627
      %v629 = vpop.f32.mrb[0].mxu0
      %630 = vmatprep.mubr.bf16.mxu0 0
      %631 = vmatmul.mubr.bf16.gmra.mrb[0].mxu0 %v501
      %v632 = vpop.f32.mrb[0].mxu0
      %v633 = vadd.f32 0.0, %v632
      %v634 = vpop.f32.mrb[0].mxu0
      %v635 = vpop.f32.mrb[0].mxu0
      %v636 = vadd.f32 0.0, %v635
      %v637 = vpop.f32.mrb[0].mxu0
      %638 = vmatprep.mubr.bf16.mxu0 0
      %639 = vmatmul.mubr.bf16.gmra.mrb[0].mxu0 %v504
      %v640 = vpop.f32.mrb[0].mxu0
      %v641 = vadd.f32 0.0, %v640
      %v642 = vpop.f32.mrb[0].mxu0
      %v643 = vpop.f32.mrb[0].mxu0
      %v644 = vadd.f32 0.0, %v643
      %v645 = vpop.f32.mrb[0].mxu0
      %646 = vmatprep.mubr.bf16.mxu0 0
      %647 = vmatmul.mubr.bf16.gmra.mrb[0].mxu0 %v507
      %v648 = vpop.f32.mrb[0].mxu0
      %v649 = vadd.f32 0.0, %v648
      %v650 = vpop.f32.mrb[0].mxu0
      %v651 = vpop.f32.mrb[0].mxu0
      %v652 = vadd.f32 0.0, %v651
      %v653 = vpop.f32.mrb[0].mxu0
      %654 = vmatprep.mubr.bf16.mxu0 0
      %655 = vmatmul.mubr.bf16.gmra.mrb[0].mxu0 %v510
      %v656 = vpop.f32.mrb[0].mxu0
      %v657 = vadd.f32 0.0, %v656
      %v658 = vpop.f32.mrb[0].mxu0
      %v659 = vpop.f32.mrb[0].mxu0
      %v660 = vadd.f32 0.0, %v659
      %v661 = vpop.f32.mrb[0].mxu0
      %662 = vmatprep.mubr.bf16.mxu0 0
      %663 = vmatmul.mubr.bf16.gmra.mrb[0].mxu0 %v513
      %v664 = vpop.f32.mrb[0].mxu0
      %v665 = vadd.f32 0.0, %v664
      %v666 = vpop.f32.mrb[0].mxu0
      %v667 = vpop.f32.mrb[0].mxu0
      %v668 = vadd.f32 0.0, %v667
      %v669 = vpop.f32.mrb[0].mxu0
      %670 = vmatprep.mubr.bf16.mxu0 0
      %671 = vmatmul.mubr.bf16.gmra.mrb[0].mxu0 %v516
      %v672 = vpop.f32.mrb[0].mxu0
      %v673 = vadd.f32 0.0, %v672
      %v674 = vpop.f32.mrb[0].mxu0
      %v675 = vpop.f32.mrb[0].mxu0
      %v676 = vadd.f32 0.0, %v675
      %v677 = vpop.f32.mrb[0].mxu0
      %678 = vdwg.mxu0
      %v679 = vld [vmem:[%s2] sm:$0xff]
      %v680 = vld [vmem:[%s2 + $0x8] sm:$0xff]
      %v681 = vadd.f32 %v617, %v679
      %v682 = vadd.f32 %v620, %v680
      %v683 = vadd.f32 %v625, %v679
      %v684 = vadd.f32 %v628, %v680
      %v685 = vadd.f32 %v633, %v679
      %v686 = vadd.f32 %v636, %v680
      %v687 = vadd.f32 %v641, %v679
      %v688 = vadd.f32 %v644, %v680
      %v689 = vadd.f32 %v649, %v679
      %v690 = vadd.f32 %v652, %v680
      %v691 = vadd.f32 %v657, %v679
      %v692 = vadd.f32 %v660, %v680
      %v693 = vadd.f32 %v665, %v679
      %v694 = vadd.f32 %v668, %v680
      %v695 = vadd.f32 %v673, %v679
      %v696 = vadd.f32 %v676, %v680
      %v697 = vmax.f32 %v681, 0.0
      %v698 = vmax.f32 %v682, 0.0
      %v699 = vmax.f32 %v683, 0.0
      %v700 = vmax.f32 %v684, 0.0
      %v701 = vmax.f32 %v685, 0.0
      %v702 = vmax.f32 %v686, 0.0
      %v703 = vmax.f32 %v687, 0.0
      %v704 = vmax.f32 %v688, 0.0
      %v705 = vmax.f32 %v689, 0.0
      %v706 = vmax.f32 %v690, 0.0
      %v707 = vmax.f32 %v691, 0.0
      %v708 = vmax.f32 %v692, 0.0
      %v709 = vmax.f32 %v693, 0.0
      %v710 = vmax.f32 %v694, 0.0
      %v711 = vmax.f32 %v695, 0.0
      %v712 = vmax.f32 %v696, 0.0
      %v713 = vmax.f32 %v697, %v698
      %v714 = vrot.slane %v713, 4
      %v715 = vmax.f32 %v713, %v714
      %v716 = vrot.slane %v715, 2
      %v717 = vmax.f32 %v715, %v716
      %v718 = vrot.slane %v717, 1
      %v719 = vmax.f32 %v717, %v718
      %v720 = vmax.f32 %v699, %v700
      %v721 = vrot.slane %v720, 4
      %v722 = vmax.f32 %v720, %v721
      %v723 = vrot.slane %v722, 2
      %v724 = vmax.f32 %v722, %v723
      %v725 = vrot.slane %v724, 1
      %v726 = vmax.f32 %v724, %v725
      %v727 = vmax.f32 %v701, %v702
      %v728 = vrot.slane %v727, 4
      %v729 = vmax.f32 %v727, %v728
      %v730 = vrot.slane %v729, 2
      %v731 = vmax.f32 %v729, %v730
      %v732 = vrot.slane %v731, 1
      %v733 = vmax.f32 %v731, %v732
      %v734 = vmax.f32 %v703, %v704
      %v735 = vrot.slane %v734, 4
      %v736 = vmax.f32 %v734, %v735
      %v737 = vrot.slane %v736, 2
      %v738 = vmax.f32 %v736, %v737
      %v739 = vrot.slane %v738, 1
      %v740 = vmax.f32 %v738, %v739
      %v741 = vmax.f32 %v705, %v706
      %v742 = vrot.slane %v741, 4
      %v743 = vmax.f32 %v741, %v742
      %v744 = vrot.slane %v743, 2
      %v745 = vmax.f32 %v743, %v744
      %v746 = vrot.slane %v745, 1
      %v747 = vmax.f32 %v745, %v746
      %v748 = vmax.f32 %v707, %v708
      %v749 = vrot.slane %v748, 4
      %v750 = vmax.f32 %v748, %v749
      %v751 = vrot.slane %v750, 2
      %v752 = vmax.f32 %v750, %v751
      %v753 = vrot.slane %v752, 1
      %v754 = vmax.f32 %v752, %v753
      %v755 = vmax.f32 %v709, %v710
      %v756 = vrot.slane %v755, 4
      %v757 = vmax.f32 %v755, %v756
      %v758 = vrot.slane %v757, 2
      %v759 = vmax.f32 %v757, %v758
      %v760 = vrot.slane %v759, 1
      %v761 = vmax.f32 %v759, %v760
      %v762 = vmax.f32 %v711, %v712
      %v763 = vrot.slane %v762, 4
      %v764 = vmax.f32 %v762, %v763
      %v765 = vrot.slane %v764, 2
      %v766 = vmax.f32 %v764, %v765
      %v767 = vrot.slane %v766, 1
      %v768 = vmax.f32 %v766, %v767
      %v769 = vpack.c.bf16 %v719, %v719
      %v770 = vpack.c.bf16 %v726, %v726
      %v771 = vpack.c.bf16 %v733, %v733
      %v772 = vpack.c.bf16 %v740, %v740
      %v773 = vpack.c.bf16 %v747, %v747
      %v774 = vpack.c.bf16 %v754, %v754
      %v775 = vpack.c.bf16 %v761, %v761
      %v776 = vpack.c.bf16 %v768, %v768
      %v777 = vld [vmem:[%s3] sm:$0xf]
      %v778 = vld [vmem:[%s3 + $0x4] sm:$0xf]
      %v779 = vld [vmem:[%s3 + $0x8] sm:$0xf]
      %v780 = vld [vmem:[%s3 + $0xc] sm:$0xf]
      %v781 = vld [vmem:[%s3 + $0x10] sm:$0xf]
      %v782 = vld [vmem:[%s3 + $0x14] sm:$0xf]
      %v783 = vld [vmem:[%s3 + $0x18] sm:$0xf]
      %v784 = vld [vmem:[%s3 + $0x1c] sm:$0xf]
      %v785 = vld [vmem:[%s3 + $0x20] sm:$0xf]
      %v786 = vld [vmem:[%s3 + $0x24] sm:$0xf]
      %v787 = vld [vmem:[%s3 + $0x28] sm:$0xf]
      %v788 = vld [vmem:[%s3 + $0x2c] sm:$0xf]
      %v789 = vld [vmem:[%s3 + $0x30] sm:$0xf]
      %v790 = vld [vmem:[%s3 + $0x34] sm:$0xf]
      %v791 = vld [vmem:[%s3 + $0x38] sm:$0xf]
      %v792 = vld [vmem:[%s3 + $0x3c] sm:$0xf]
      %v793 = vld [vmem:[%s4] sm:$0x1]
      %v795 = vlaneseq
      %v796 = vshrl.u32 %v795, 7
      %v797 = vsub.s32 0, %v796
      %v798 = vrot.slane %v793, %v797
      %v808 = vunpack.c.l.b16 %v769
      %v809 = vunpack.c.l.b16 %v770
      %v810 = vunpack.c.l.b16 %v771
      %v811 = vunpack.c.l.b16 %v772
      %v812 = vunpack.c.l.b16 %v773
      %v813 = vunpack.c.l.b16 %v774
      %v814 = vunpack.c.l.b16 %v775
      %v815 = vunpack.c.l.b16 %v776
      %vm816 = vcmask 1041409
      %v817 = vsel %vm816, %v809, %v808
      %vm818 = vcmask 1042434
      %v819 = vsel %vm818, %v810, %v817
      %vm820 = vcmask 1043459
      %v821 = vsel %vm820, %v811, %v819
      %vm822 = vcmask 1044484
      %v823 = vsel %vm822, %v812, %v821
      %vm824 = vcmask 1045509
      %v825 = vsel %vm824, %v813, %v823
      %vm826 = vcmask 1046534
      %v827 = vsel %vm826, %v814, %v825
      %vm828 = vcmask 1047559
      %v829 = vsel %vm828, %v815, %v827
      %v830 = vpack.c.b16 %v829, %v829
      %v848 = vunpack.c.l.b16 %v777
      %v849 = vunpack.c.l.b16 %v778
      %v850 = vunpack.c.l.b16 %v779
      %v851 = vunpack.c.l.b16 %v780
      %v852 = vunpack.c.l.b16 %v781
      %v853 = vunpack.c.l.b16 %v782
      %v854 = vunpack.c.l.b16 %v783
      %v855 = vunpack.c.l.b16 %v784
      %v856 = vunpack.c.l.b16 %v785
      %v857 = vunpack.c.l.b16 %v786
      %v858 = vunpack.c.l.b16 %v787
      %v859 = vunpack.c.l.b16 %v788
      %v860 = vunpack.c.l.b16 %v789
      %v861 = vunpack.c.l.b16 %v790
      %v862 = vunpack.c.l.b16 %v791
      %v863 = vunpack.c.l.b16 %v792
      %v864 = vpack.c.b16 %v849, %v848
      %v865 = vpack.c.b16 %v851, %v850
      %v866 = vpack.c.b16 %v853, %v852
      %v867 = vpack.c.b16 %v855, %v854
      %v868 = vpack.c.b16 %v857, %v856
      %v869 = vpack.c.b16 %v859, %v858
      %v870 = vpack.c.b16 %v861, %v860
      %v871 = vpack.c.b16 %v863, %v862
      %880 = vmatprep.subr.bf16.mxu0 0
      %881 = vmatpush1.bf16.msra.mxu0 %v864
      %882 = vmatprep.subr.bf16.mxu0 0
      %883 = vmatpush1.bf16.msra.mxu0 %v865
      %884 = vmatprep.subr.bf16.mxu0 0
      %885 = vmatpush1.bf16.msra.mxu0 %v866
      %886 = vmatprep.subr.bf16.mxu0 0
      %887 = vmatpush1.bf16.msra.mxu0 %v867
      %888 = vmatprep.subr.bf16.mxu0 0
      %889 = vmatpush1.bf16.msra.mxu0 %v868
      %890 = vmatprep.subr.bf16.mxu0 0
      %891 = vmatpush1.bf16.msra.mxu0 %v869
      %892 = vmatprep.subr.bf16.mxu0 0
      %893 = vmatpush1.bf16.msra.mxu0 %v870
      %894 = vmatprep.subr.bf16.mxu0 0
      %895 = vmatpush1.bf16.msra.mxu0 %v871
      %896 = vmatprep.subr.bf16.mxu0 0
      %897 = vmatpush1.bf16.msra.mxu0 0
      %898 = vmatprep.subr.bf16.mxu0 0
      %899 = vmatpush1.bf16.msra.mxu0 0
      %900 = vmatprep.subr.bf16.mxu0 0
      %901 = vmatpush1.bf16.msra.mxu0 0
      %902 = vmatprep.subr.bf16.mxu0 0
      %903 = vmatpush1.bf16.msra.mxu0 0
      %904 = vmatprep.subr.bf16.mxu0 0
      %905 = vmatpush1.bf16.msra.mxu0 0
      %906 = vmatprep.subr.bf16.mxu0 0
      %907 = vmatpush1.bf16.msra.mxu0 0
      %908 = vmatprep.subr.bf16.mxu0 0
      %909 = vmatpush1.bf16.msra.mxu0 0
      %910 = vmatprep.subr.bf16.mxu0 0
      %911 = vmatpush1.bf16.msra.mxu0 0
      %912 = vmatprep.mubr.bf16.mxu0 0
      %913 = vmatmul.mubr.bf16.gmra.mrb[0].mxu0 %v830
      %v914 = vpop.f32.mrb[0].mxu0
      %v915 = vadd.f32 %v798, %v914
      %v916 = vpop.f32.mrb[0].mxu0
      %v917 = vpop.f32.mrb[0].mxu0
      %v918 = vpop.f32.mrb[0].mxu0
      %919 = vdwg.mxu0
      %920 = vst [vmem:[%s227] sm:$0xff] %v915
      %p921 = scmp.lt.s32.totalorder %s16, 1
      %s922 = scalar_select %p921, %s16, 1
      %s923 = smul.addr %s922, 8
      %s924 = scalar_lea.vmem %s5, %s923
      // Predicated region
      $region41: #{textcnn_forward.1} parent=39 // pred_check
        %p925 = pneg %p144
      $region42: #{textcnn_forward.1} parent=39 // pred_check_branch
        %927 = sbr.rel (%p925) target = $region44
      $region43: #{textcnn_forward.1} parent=39 // pred_region
        _
      $region44: #{textcnn_forward.1} parent=39 // pred_fallthru
        _
    $region40: #{textcnn_forward.1} parent=5 // pred_fallthru
      _
    %p928 = scmp.le.s32.totalorder 2, %s11
    // Predicated region
    $region45: #{textcnn_forward.1} parent=5 // pred_check
      %p929 = pneg %p928
    $region46: #{textcnn_forward.1} parent=5 // pred_check_branch
      %931 = sbr.rel (%p929) target = $region48
    $region47: #{textcnn_forward.1} parent=5 // pred_region
      %s932 = ssub.s32 %s11, 2
      // Predicated region
      $region49: #{textcnn_forward.1} parent=47 // pred_check
        %p933 = pneg %p150
      $region50: #{textcnn_forward.1} parent=47 // pred_check_branch
        %935 = sbr.rel (%p933) target = $region52
      $region51: #{textcnn_forward.1} parent=47 // pred_region
        %p936 = scmp.lt.s32.totalorder %s17, 1
        %s937 = scalar_select %p936, %s17, 1
        %s938 = smul.addr %s937, 8
        %s939 = scalar_lea.vmem %s5, %s938
      $region52: #{textcnn_forward.1} parent=47 // pred_fallthru
        _
    $region48: #{textcnn_forward.1} parent=5 // pred_fallthru
      _
  $region6: #{textcnn_forward.1} parent=0 // loop_footer
    %s15 = sadd.s32 1, %s11
  $region7: #{textcnn_forward.1} parent=0 // loop_footer_branch
    %10 = sbr.rel target = $region3
  $region8: #{textcnn_forward.1} parent=0 // loop_exit
    _

</llo_original>
